<compile_context>
chip_gen: v6e
topology: v6e:2x2x1
jax: 0.10.0
libtpu: 0.0.40
codegen_flags: <defaults>
</compile_context>

<pallas_src>
import functools

import jax
import jax.numpy as jnp
from jax.experimental import pallas as pl
from jax.experimental.pallas import tpu as pltpu

_TB_MAX = 8192  # max batch-tile rows (multiple of 8); ~4.3 MiB double-buffered


def _round_up(n, m):
    return (n + m - 1) // m * m


def _mlp_kernel(x_ref, w1_ref, b1_ref, w2_ref, b2_ref, o_ref):
    # fc1: (tb, in) @ (in, hidden) -> f32 accumulate on MXU
    h = jnp.dot(x_ref[...], w1_ref[...], preferred_element_type=jnp.float32)
    # bias + ReLU in f32 on the VPU
    h = jnp.maximum(h + b1_ref[...], 0.0)
    # fc2: (tb, hidden) @ (hidden, out) -> f32 accumulate on MXU
    y = jnp.dot(h, w2_ref[...], preferred_element_type=jnp.float32)
    o_ref[...] = (y + b2_ref[...]).astype(o_ref.dtype)


@functools.partial(jax.jit, static_argnames=())
def simple_test_model_forward(x, w1, b1, w2, b2):
    """Forward pass of SimpleTestModel.

    x:  (B, input_size)
    w1: (input_size, hidden)   -- stored transposed vs. torch (so y = x @ W)
    b1: (hidden,)
    w2: (hidden, output_size)
    b2: (output_size,)
    """
    B, in_size = x.shape
    hidden = w1.shape[1]
    out_size = w2.shape[1]

    # Biases as (1, N) rows so the kernel broadcast is 2-D (trivial reshape).
    b1_r = b1.reshape(1, hidden)
    b2_r = b2.reshape(1, out_size)

    # Batch tile: big enough to amortize per-step overhead, capped so the grid
    # has >= 2 steps when possible (lets v7x shard across its 2 TensorCores).
    tb = max(8, min(_TB_MAX, _round_up(pl.cdiv(B, 2), 8)))
    grid = (pl.cdiv(B, tb),)

    flops = 2 * B * (in_size * hidden + hidden * out_size)
    bytes_accessed = 4 * (
        B * in_size                      # x read
        + in_size * hidden + hidden      # fc1 params
        + hidden * out_size + out_size   # fc2 params
        + B * out_size                   # y write
    )

    return pl.pallas_call(
        _mlp_kernel,
        out_shape=jax.ShapeDtypeStruct((B, out_size), x.dtype),
        grid_spec=pltpu.PrefetchScalarGridSpec(
            num_scalar_prefetch=0,
            grid=grid,
            in_specs=[
                # x tile marches along the batch axis (partial last block OK).
                pl.BlockSpec((tb, in_size), lambda i: (i, 0)),
                # weights/biases: constant block index -> VMEM-resident
                pl.BlockSpec((in_size, hidden), lambda i: (0, 0)),
                pl.BlockSpec((1, hidden), lambda i: (0, 0)),
                pl.BlockSpec((hidden, out_size), lambda i: (0, 0)),
                pl.BlockSpec((1, out_size), lambda i: (0, 0)),
            ],
            # Output written at its real width: block last dim == full dim.
            out_specs=pl.BlockSpec((tb, out_size), lambda i: (i, 0)),
        ),
        compiler_params=pltpu.CompilerParams(
            dimension_semantics=("parallel",),
        ),
        cost_estimate=pl.CostEstimate(
            flops=flops, transcendentals=0, bytes_accessed=bytes_accessed),
    )(x, w1, b1_r, w2, b2_r)


def init_params(key, input_size=64, hidden=32, output_size=4, dtype=jnp.float32):
    """Deterministic init mimicking PyTorch nn.Linear default (uniform +/- 1/sqrt(fan_in))."""
    k1, k2, k3, k4 = jax.random.split(key, 4)
    bound1 = 1.0 / jnp.sqrt(input_size)
    bound2 = 1.0 / jnp.sqrt(hidden)
    # Stored already transposed: (in_features, out_features)
    w1 = jax.random.uniform(k1, (input_size, hidden), dtype, -bound1, bound1)
    b1 = jax.random.uniform(k2, (hidden,), dtype, -bound1, bound1)
    w2 = jax.random.uniform(k3, (hidden, output_size), dtype, -bound2, bound2)
    b2 = jax.random.uniform(k4, (output_size,), dtype, -bound2, bound2)
    return w1, b1, w2, b2


if __name__ == "__main__":
    key = jax.random.PRNGKey(0)
    k_x, k_p = jax.random.split(key)

    B, INPUT_SIZE, HIDDEN, OUTPUT_SIZE = 8, 64, 32, 4
    x = jax.random.normal(k_x, (B, INPUT_SIZE), jnp.float32)
    w1, b1, w2, b2 = init_params(k_p, INPUT_SIZE, HIDDEN, OUTPUT_SIZE)

    out = simple_test_model_forward(x, w1, b1, w2, b2)
    out = jax.block_until_ready(out)

    # Reference check in plain JAX (same math as the PyTorch module, f32).
    ref = jnp.maximum(x @ w1 + b1, 0.0) @ w2 + b2
    assert out.shape == (B, OUTPUT_SIZE), out.shape
    assert jnp.allclose(out, ref, atol=1e-5, rtol=1e-5), (
        float(jnp.max(jnp.abs(out - ref))))

    # Odd batch size not a multiple of 8: exercises the partial-last-block
    # path (no pre-padding) and a multi-step pipelined grid.
    B2 = 2500
    x2 = jax.random.normal(jax.random.PRNGKey(1), (B2, INPUT_SIZE), jnp.float32)
    out2 = jax.block_until_ready(simple_test_model_forward(x2, w1, b1, w2, b2))
    ref2 = jnp.maximum(x2 @ w1 + b1, 0.0) @ w2 + b2
    assert out2.shape == (B2, OUTPUT_SIZE)
    assert jnp.allclose(out2, ref2, atol=1e-5, rtol=1e-5), (
        float(jnp.max(jnp.abs(out2 - ref2))))

    print("KERNEL_OK")
</pallas_src>

<mosaic_0001>
module attributes {stable_mosaic.version = 11 : i64} {
  func.func @_mlp_kernel(%arg0: i32, %arg1: memref<8x64xf32, #tpu.memory_space<vmem>>, %arg2: memref<64x32xf32, #tpu.memory_space<vmem>>, %arg3: memref<1x32xf32, #tpu.memory_space<vmem>>, %arg4: memref<32x4xf32, #tpu.memory_space<vmem>>, %arg5: memref<1x4xf32, #tpu.memory_space<vmem>>, %arg6: memref<8x4xf32, #tpu.memory_space<vmem>>) attributes {dimension_semantics = [#tpu.dimension_semantics<parallel>], iteration_bounds = array<i64: 1>, scalar_prefetch = 0 : i64, scratch_operands = 0 : i64, tpu.core_type = #tpu.core_type<tc>, window_params = [{transform_indices = @transform_0, window_bounds = array<i64: 8, 64>}, {pipeline_mode = #tpu.pipeline_mode<synchronous>, transform_indices = @transform_1, window_bounds = array<i64: 64, 32>}, {pipeline_mode = #tpu.pipeline_mode<synchronous>, transform_indices = @transform_2, window_bounds = array<i64: 1, 32>}, {pipeline_mode = #tpu.pipeline_mode<synchronous>, transform_indices = @transform_3, window_bounds = array<i64: 32, 4>}, {pipeline_mode = #tpu.pipeline_mode<synchronous>, transform_indices = @transform_4, window_bounds = array<i64: 1, 4>}, {transform_indices = @transform_5, window_bounds = array<i64: 8, 4>}]} {
    %c0 = arith.constant 0 : index
    %c0_0 = arith.constant 0 : index
    %0 = vector.load %arg1[%c0, %c0_0] : memref<8x64xf32, #tpu.memory_space<vmem>>, vector<8x64xf32>
    %c0_1 = arith.constant 0 : index
    %c0_2 = arith.constant 0 : index
    %1 = vector.load %arg2[%c0_1, %c0_2] : memref<64x32xf32, #tpu.memory_space<vmem>>, vector<64x32xf32>
    %cst = arith.constant dense<0.000000e+00> : vector<8x32xf32>
    %2 = tpu.matmul %0, %1, %cst {dimension_numbers = #tpu.dot_dimension_numbers<[1], [0], [0], [1], [0, 0, 1, 1], [], []>} : vector<8x64xf32>, vector<64x32xf32>, vector<8x32xf32> -> vector<8x32xf32>
    %c0_3 = arith.constant 0 : index
    %c0_4 = arith.constant 0 : index
    %3 = vector.load %arg3[%c0_3, %c0_4] : memref<1x32xf32, #tpu.memory_space<vmem>>, vector<1x32xf32>
    %4 = vector.broadcast %3 : vector<1x32xf32> to vector<8x32xf32>
    %5 = arith.addf %2, %4 : vector<8x32xf32>
    %cst_5 = arith.constant 0.000000e+00 : f32
    %6 = vector.broadcast %cst_5 : f32 to vector<8x32xf32>
    %7 = arith.maximumf %5, %6 : vector<8x32xf32>
    %c0_6 = arith.constant 0 : index
    %c0_7 = arith.constant 0 : index
    %8 = vector.load %arg4[%c0_6, %c0_7] : memref<32x4xf32, #tpu.memory_space<vmem>>, vector<32x4xf32>
    %cst_8 = arith.constant dense<0.000000e+00> : vector<8x4xf32>
    %9 = tpu.matmul %7, %8, %cst_8 {dimension_numbers = #tpu.dot_dimension_numbers<[1], [0], [0], [1], [0, 0, 1, 1], [], []>} : vector<8x32xf32>, vector<32x4xf32>, vector<8x4xf32> -> vector<8x4xf32>
    %c0_9 = arith.constant 0 : index
    %c0_10 = arith.constant 0 : index
    %10 = vector.load %arg5[%c0_9, %c0_10] : memref<1x4xf32, #tpu.memory_space<vmem>>, vector<1x4xf32>
    %11 = vector.broadcast %10 : vector<1x4xf32> to vector<8x4xf32>
    %12 = arith.addf %9, %11 : vector<8x4xf32>
    %c0_11 = arith.constant 0 : index
    %c0_12 = arith.constant 0 : index
    %13 = vector.load %arg6[%c0_11, %c0_12] : memref<8x4xf32, #tpu.memory_space<vmem>>, vector<8x4xf32>
    tpu.vector_store %arg6[%c0_11, %c0_12], %12 {strides = array<i32>} : memref<8x4xf32, #tpu.memory_space<vmem>>, vector<8x4xf32>,
    return
  }
  func.func @transform_0(%arg0: i32) -> (i32, i32) {
    %c0_i32 = arith.constant 0 : i32
    %c0_i32_0 = arith.constant 0 : i32
    return %arg0, %c0_i32 : i32, i32
  }
  func.func @transform_1(%arg0: i32) -> (i32, i32) {
    %c0_i32 = arith.constant 0 : i32
    %c0_i32_0 = arith.constant 0 : i32
    %c0_i32_1 = arith.constant 0 : i32
    return %c0_i32, %c0_i32_0 : i32, i32
  }
  func.func @transform_2(%arg0: i32) -> (i32, i32) {
    %c0_i32 = arith.constant 0 : i32
    %c0_i32_0 = arith.constant 0 : i32
    %c0_i32_1 = arith.constant 0 : i32
    return %c0_i32, %c0_i32_0 : i32, i32
  }
  func.func @transform_3(%arg0: i32) -> (i32, i32) {
    %c0_i32 = arith.constant 0 : i32
    %c0_i32_0 = arith.constant 0 : i32
    %c0_i32_1 = arith.constant 0 : i32
    return %c0_i32, %c0_i32_0 : i32, i32
  }
  func.func @transform_4(%arg0: i32) -> (i32, i32) {
    %c0_i32 = arith.constant 0 : i32
    %c0_i32_0 = arith.constant 0 : i32
    %c0_i32_1 = arith.constant 0 : i32
    return %c0_i32, %c0_i32_0 : i32, i32
  }
  func.func @transform_5(%arg0: i32) -> (i32, i32) {
    %c0_i32 = arith.constant 0 : i32
    %c0_i32_0 = arith.constant 0 : i32
    return %arg0, %c0_i32 : i32, i32
  }
}

</mosaic_0001>

<llo_original>
// kernel: simple_test_model_forward.1
$region0: #{simple_test_model_forward.1}
  #allocation0 [shape = 'u32[]', space=smem, size = 0x4, offset = 0x4, fixed_abs, tag = 'smem constant byte address 0x4 - core index']
  #allocation1 [shape = 'u32[144,128]{1,0:T(1,128)}', space=vmem, size = 0x12000, scoped, tag = 'internal scratch']
  %s0 = inlined_call_operand.vmem [shape: f32[8,64], index: 0, kind: input, shape index: {}]
  %s1 = inlined_call_operand.vmem [shape: f32[64,32], index: 1, kind: input, shape index: {}]
  %s2 = inlined_call_operand.vmem [shape: f32[1,32], index: 2, kind: input, shape index: {}]
  %s3 = inlined_call_operand.vmem [shape: f32[32,4], index: 3, kind: input, shape index: {}]
  %s4 = inlined_call_operand.vmem [shape: f32[1,4], index: 4, kind: input, shape index: {}]
  %s5 = inlined_call_operand.vmem [shape: f32[8,4], index: 5, kind: output, shape index: {}]
  %s6 = sld [smem:[#allocation0]]
  $region30: #{simple_test_model_forward.1} parent=0
    _
  %s8 = ssub.s32 1, %s6
  %s9 = scalar_select 0, %s8, %s6
  // Predicated region
  $region2: #{simple_test_model_forward.1} parent=0 // pred_check
    _
  $region3: #{simple_test_model_forward.1} parent=0 // pred_check_branch
    %11 = sbr.rel (0) target = $region5
  $region4: #{simple_test_model_forward.1} parent=0 // pred_region
    _
  $region5: #{simple_test_model_forward.1} parent=0 // pred_fallthru
    _
  // Predicated region
  $region6: #{simple_test_model_forward.1} parent=0 // pred_check
    _
  $region7: #{simple_test_model_forward.1} parent=0 // pred_check_branch
    %13 = sbr.rel (0) target = $region9
  $region8: #{simple_test_model_forward.1} parent=0 // pred_region
    _
  $region9: #{simple_test_model_forward.1} parent=0 // pred_fallthru
    _
  // Predicated region
  $region10: #{simple_test_model_forward.1} parent=0 // pred_check
    _
  $region11: #{simple_test_model_forward.1} parent=0 // pred_check_branch
    %15 = sbr.rel (0) target = $region13
  $region12: #{simple_test_model_forward.1} parent=0 // pred_region
    _
  $region13: #{simple_test_model_forward.1} parent=0 // pred_fallthru
    _
  // Predicated region
  $region14: #{simple_test_model_forward.1} parent=0 // pred_check
    _
  $region15: #{simple_test_model_forward.1} parent=0 // pred_check_branch
    %17 = sbr.rel (0) target = $region17
  $region16: #{simple_test_model_forward.1} parent=0 // pred_region
    _
  $region17: #{simple_test_model_forward.1} parent=0 // pred_fallthru
    _
  // Predicated region
  $region18: #{simple_test_model_forward.1} parent=0 // pred_check
    _
  $region19: #{simple_test_model_forward.1} parent=0 // pred_check_branch
    %19 = sbr.rel (0) target = $region21
  $region20: #{simple_test_model_forward.1} parent=0 // pred_region
    _
  $region21: #{simple_test_model_forward.1} parent=0 // pred_fallthru
    _
  %v20 = vld [vmem:[%s0] sm:$0xff]
  %v21 = vld [vmem:[%s1] sm:$0xff]
  %v22 = vld [vmem:[%s1 + $0x8] sm:$0xff]
  %v23 = vld [vmem:[%s1 + $0x10] sm:$0xff]
  %v24 = vld [vmem:[%s1 + $0x18] sm:$0xff]
  %v25 = vld [vmem:[%s1 + $0x20] sm:$0xff]
  %v26 = vld [vmem:[%s1 + $0x28] sm:$0xff]
  %v27 = vld [vmem:[%s1 + $0x30] sm:$0xff]
  %v28 = vld [vmem:[%s1 + $0x38] sm:$0xff]
  %v29 = vld [vmem:[%s2] sm:$0x1]
  %v31 = vlaneseq
  %v32 = vshrl.u32 %v31, 7
  %v33 = vsub.s32 0, %v32
  %v34 = vrot.slane %v29, %v33
  %vm36 = vcmask 523264
  %v38 = vsel %vm36, %v20, 0
  %40 = vmatprep.subr.mxu0 0.0
  %41 = vmatpush1.msra.mxu0 0.0
  %42 = vmatprep.subr.mxu0 0.0
  %43 = vmatpush1.msra.mxu0 0.0
  %44 = vmatprep.subr.mxu0 0.0
  %45 = vmatpush1.msra.mxu0 0.0
  %46 = vmatprep.subr.mxu0 0.0
  %47 = vmatpush1.msra.mxu0 0.0
  %48 = vmatprep.subr.mxu0 0.0
  %49 = vmatpush1.msra.mxu0 0.0
  %50 = vmatprep.subr.mxu0 0.0
  %51 = vmatpush1.msra.mxu0 0.0
  %52 = vmatprep.subr.mxu0 0.0
  %53 = vmatpush1.msra.mxu0 0.0
  %54 = vmatprep.subr.mxu0 0.0
  %55 = vmatpush1.msra.mxu0 0.0
  %56 = vmatprep.subr.mxu0 0.0
  %57 = vmatpush1.msra.mxu0 %v28
  %58 = vmatprep.subr.mxu0 0.0
  %59 = vmatpush1.msra.mxu0 %v27
  %60 = vmatprep.subr.mxu0 0.0
  %61 = vmatpush1.msra.mxu0 %v26
  %62 = vmatprep.subr.mxu0 0.0
  %63 = vmatpush1.msra.mxu0 %v25
  %64 = vmatprep.subr.mxu0 0.0
  %65 = vmatpush1.msra.mxu0 %v24
  %66 = vmatprep.subr.mxu0 0.0
  %67 = vmatpush1.msra.mxu0 %v23
  %68 = vmatprep.subr.mxu0 0.0
  %69 = vmatpush1.msra.mxu0 %v22
  %70 = vmatprep.subr.mxu0 0.0
  %71 = vmatpush1.msra.mxu0 %v21
  %72 = vmatprep.subr.mxu0 0.0
  %73 = vmatpush2.msra.mxu0 0.0
  %74 = vmatprep.subr.mxu0 0.0
  %75 = vmatpush2.msra.mxu0 0.0
  %76 = vmatprep.subr.mxu0 0.0
  %77 = vmatpush2.msra.mxu0 0.0
  %78 = vmatprep.subr.mxu0 0.0
  %79 = vmatpush2.msra.mxu0 0.0
  %80 = vmatprep.subr.mxu0 0.0
  %81 = vmatpush2.msra.mxu0 0.0
  %82 = vmatprep.subr.mxu0 0.0
  %83 = vmatpush2.msra.mxu0 0.0
  %84 = vmatprep.subr.mxu0 0.0
  %85 = vmatpush2.msra.mxu0 0.0
  %86 = vmatprep.subr.mxu0 0.0
  %87 = vmatpush2.msra.mxu0 0.0
  %88 = vmatprep.subr.mxu0 0.0
  %89 = vmatpush2.msra.mxu0 0.0
  %90 = vmatprep.subr.mxu0 0.0
  %91 = vmatpush2.msra.mxu0 0.0
  %92 = vmatprep.subr.mxu0 0.0
  %93 = vmatpush2.msra.mxu0 0.0
  %94 = vmatprep.subr.mxu0 0.0
  %95 = vmatpush2.msra.mxu0 0.0
  %96 = vmatprep.subr.mxu0 0.0
  %97 = vmatpush2.msra.mxu0 0.0
  %98 = vmatprep.subr.mxu0 0.0
  %99 = vmatpush2.msra.mxu0 0.0
  %100 = vmatprep.subr.mxu0 0.0
  %101 = vmatpush2.msra.mxu0 0.0
  %102 = vmatprep.subr.mxu0 0.0
  %103 = vmatpush2.msra.mxu0 0.0
  %104 = vmatprep.mubr.f32.mxu0 0.0
  %105 = vmatmul.mubr.f32.gmra.mxu0 %v38
  %v106 = vpop.f32.mrf.mxu0
  %v107 = vadd.f32 %v34, %v106
  %v108 = vpop.f32.mrf.mxu0
  %109 = vdwg.mxu0
  %v110 = vmax.f32 %v107, 0.0
  %v111 = vld [vmem:[%s3] sm:$0xff]
  %v112 = vld [vmem:[%s3 + $0x8] sm:$0xff]
  %v113 = vld [vmem:[%s3 + $0x10] sm:$0xff]
  %v114 = vld [vmem:[%s3 + $0x18] sm:$0xff]
  %v115 = vld [vmem:[%s4] sm:$0x1]
  %v117 = vlaneseq
  %v118 = vshrl.u32 %v117, 7
  %v119 = vsub.s32 0, %v118
  %v120 = vrot.slane %v115, %v119
  %vm122 = vcmask 261120
  %v124 = vsel %vm122, %v110, 0
  %126 = vmatprep.subr.mxu0 0.0
  %127 = vmatpush1.msra.mxu0 0.0
  %128 = vmatprep.subr.mxu0 0.0
  %129 = vmatpush1.msra.mxu0 0.0
  %130 = vmatprep.subr.mxu0 0.0
  %131 = vmatpush1.msra.mxu0 0.0
  %132 = vmatprep.subr.mxu0 0.0
  %133 = vmatpush1.msra.mxu0 0.0
  %134 = vmatprep.subr.mxu0 0.0
  %135 = vmatpush1.msra.mxu0 0.0
  %136 = vmatprep.subr.mxu0 0.0
  %137 = vmatpush1.msra.mxu0 0.0
  %138 = vmatprep.subr.mxu0 0.0
  %139 = vmatpush1.msra.mxu0 0.0
  %140 = vmatprep.subr.mxu0 0.0
  %141 = vmatpush1.msra.mxu0 0.0
  %142 = vmatprep.subr.mxu0 0.0
  %143 = vmatpush1.msra.mxu0 0.0
  %144 = vmatprep.subr.mxu0 0.0
  %145 = vmatpush1.msra.mxu0 0.0
  %146 = vmatprep.subr.mxu0 0.0
  %147 = vmatpush1.msra.mxu0 0.0
  %148 = vmatprep.subr.mxu0 0.0
  %149 = vmatpush1.msra.mxu0 0.0
  %150 = vmatprep.subr.mxu0 0.0
  %151 = vmatpush1.msra.mxu0 %v114
  %152 = vmatprep.subr.mxu0 0.0
  %153 = vmatpush1.msra.mxu0 %v113
  %154 = vmatprep.subr.mxu0 0.0
  %155 = vmatpush1.msra.mxu0 %v112
  %156 = vmatprep.subr.mxu0 0.0
  %157 = vmatpush1.msra.mxu0 %v111
  %158 = vmatprep.subr.mxu0 0.0
  %159 = vmatpush2.msra.mxu0 0.0
  %160 = vmatprep.subr.mxu0 0.0
  %161 = vmatpush2.msra.mxu0 0.0
  %162 = vmatprep.subr.mxu0 0.0
  %163 = vmatpush2.msra.mxu0 0.0
  %164 = vmatprep.subr.mxu0 0.0
  %165 = vmatpush2.msra.mxu0 0.0
  %166 = vmatprep.subr.mxu0 0.0
  %167 = vmatpush2.msra.mxu0 0.0
  %168 = vmatprep.subr.mxu0 0.0
  %169 = vmatpush2.msra.mxu0 0.0
  %170 = vmatprep.subr.mxu0 0.0
  %171 = vmatpush2.msra.mxu0 0.0
  %172 = vmatprep.subr.mxu0 0.0
  %173 = vmatpush2.msra.mxu0 0.0
  %174 = vmatprep.subr.mxu0 0.0
  %175 = vmatpush2.msra.mxu0 0.0
  %176 = vmatprep.subr.mxu0 0.0
  %177 = vmatpush2.msra.mxu0 0.0
  %178 = vmatprep.subr.mxu0 0.0
  %179 = vmatpush2.msra.mxu0 0.0
  %180 = vmatprep.subr.mxu0 0.0
  %181 = vmatpush2.msra.mxu0 0.0
  %182 = vmatprep.subr.mxu0 0.0
  %183 = vmatpush2.msra.mxu0 0.0
  %184 = vmatprep.subr.mxu0 0.0
  %185 = vmatpush2.msra.mxu0 0.0
  %186 = vmatprep.subr.mxu0 0.0
  %187 = vmatpush2.msra.mxu0 0.0
  %188 = vmatprep.subr.mxu0 0.0
  %189 = vmatpush2.msra.mxu0 0.0
  %190 = vmatprep.mubr.f32.mxu0 0.0
  %191 = vmatmul.mubr.f32.gmra.mxu0 %v124
  %v192 = vpop.f32.mrf.mxu0
  %v193 = vadd.f32 %v120, %v192
  %v194 = vpop.f32.mrf.mxu0
  %195 = vdwg.mxu0
  %vm196 = vcmask 31744
  %197 = vst.msk [vmem:[%s5] sm:$0xff] %vm196, %v193
  // Predicated region
  $region22: #{simple_test_model_forward.1} parent=0 // pred_check
    _
  $region23: #{simple_test_model_forward.1} parent=0 // pred_check_branch
    %199 = sbr.rel (0) target = $region25
  $region24: #{simple_test_model_forward.1} parent=0 // pred_region
    _
  $region25: #{simple_test_model_forward.1} parent=0 // pred_fallthru
    _
  // Predicated region
  $region26: #{simple_test_model_forward.1} parent=0 // pred_check
    _
  $region27: #{simple_test_model_forward.1} parent=0 // pred_check_branch
    %201 = sbr.rel (0) target = $region29
  $region28: #{simple_test_model_forward.1} parent=0 // pred_region
    _
  $region29: #{simple_test_model_forward.1} parent=0 // pred_fallthru
    _

</llo_original>
